<compile_context>
chip_gen: v7x
topology: tpu7x:2x2x1
jax: 0.10.0
libtpu: 0.0.40
codegen_flags: <defaults>
</compile_context>

<pallas_src>
import functools

import jax
import jax.numpy as jnp
from jax import lax
from jax.experimental import pallas as pl
from jax.experimental.pallas import tpu as pltpu

LANE = 128
SUB = 8
BIG = jnp.iinfo(jnp.int32).max
NEG_INF = float("-inf")


def _round_up(x, m):
    return ((x + m - 1) // m) * m


def _make_kernel(n_total, k, tile_rows):
    """Kernel closure over static N (valid candidate count), k, and tile rows."""
    n_chunks = tile_rows // SUB

    def kernel(loc_ref, scale_ref, eps_ref, out_ref, run_v_ref, work_v_ref, work_i_ref):
        step = pl.program_id(0)

        # ---- hoisted constants / iotas (emitted once per grid step, reused in k-loop) ----
        row_t = lax.broadcasted_iota(jnp.int32, (tile_rows, LANE), 0)
        col_t = lax.broadcasted_iota(jnp.int32, (tile_rows, LANE), 1)
        neg_inf_tile = jnp.full((tile_rows, LANE), NEG_INF, jnp.float32)
        big_tile = jnp.full((tile_rows, LANE), BIG, jnp.int32)
        neg_inf_acc = jnp.full((SUB, LANE), NEG_INF, jnp.float32)
        big_acc = jnp.full((SUB, LANE), BIG, jnp.int32)
        row_a = lax.broadcasted_iota(jnp.int32, (SUB, LANE), 0)
        col_a = lax.broadcasted_iota(jnp.int32, (SUB, LANE), 1)

        # ---- init the running top-k carry on the first tile ----
        @pl.when(step == 0)
        def _():
            run_v_ref[...] = neg_inf_acc
            out_ref[...] = big_acc

        # ---- reparameterized sample for this tile, dense (tile_rows, 128) layout ----
        sample = loc_ref[...] + scale_ref[...] * eps_ref[...]
        flat = (step * tile_rows + row_t) * LANE + col_t          # global flat candidate index
        valid = flat < n_total                                    # mask padding lanes
        work_v_ref[...] = jnp.where(valid, sample, neg_inf_tile)
        work_i_ref[...] = jnp.where(valid, flat, big_tile)

        run_v = run_v_ref[...]        # running top-k values (previous tiles)
        run_i = out_ref[...]          # running top-k indices (previous tiles)

        new_v = neg_inf_acc
        new_i = big_acc

        def chunk_body(c, carry):
            # Stage A step: VPU-only elementwise fold of one 8-row chunk,
            # carrying (value, index) pairs; strict ">" keeps the earlier
            # (smaller flat index) element on ties.
            av, ai = carry
            off = c * SUB
            if not isinstance(off, int):
                off = pl.multiple_of(off, SUB)
            cv = work_v_ref[pl.ds(off, SUB), :]
            ci = work_i_ref[pl.ds(off, SUB), :]
            take = cv > av
            return jnp.maximum(av, cv), jnp.where(take, ci, ai)

        for t in range(k):  # k is small & static -> unrolled
            # Stage A: fold (running-top-k  U  current tile) down to one (8,128) vreg.
            if n_chunks <= 4:
                acc_v, acc_i = run_v, run_i
                for c in range(n_chunks):
                    acc_v, acc_i = chunk_body(c, (acc_v, acc_i))
            else:
                acc_v, acc_i = lax.fori_loop(0, n_chunks, chunk_body, (run_v, run_i))

            # Stage B: fixed-cost XLU reduce of the single (8,128) accumulator.
            m = jnp.max(acc_v, keepdims=True)                     # (1,1) max value
            cand = jnp.where(acc_v >= m, acc_i, big_acc)
            sel = jnp.min(cand, keepdims=True)                    # (1,1) smallest idx among maxima

            slot = (row_a == 0) & (col_a == t)                    # lane t of row 0
            new_v = jnp.where(slot, m, new_v)
            new_i = jnp.where(slot, sel, new_i)

            # Exclude the selected element *by index* before the next pick
            # (value -> -inf AND index -> BIG: no duplicate indices possible).
            run_v = jnp.where(run_i == sel, neg_inf_acc, run_v)
            run_i = jnp.where(run_i == sel, big_acc, run_i)
            if t + 1 < k:
                wi = work_i_ref[...]
                work_v_ref[...] = jnp.where(wi == sel, neg_inf_tile, work_v_ref[...])
                work_i_ref[...] = jnp.where(wi == sel, big_tile, wi)

        # Write the merged running top-k (resident output block + value scratch).
        run_v_ref[...] = new_v
        out_ref[...] = new_i

    return kernel


def thompson_sampling(loc, scale, eps, acquisition_size=1, tile_rows=1024):
    """loc, scale, eps: (N,) float32. Returns (acquisition_size,) int32 indices
    of the top-k reparameterized samples loc + scale * eps (torch.topk, dim=0)."""
    n = int(loc.shape[0])
    k = int(acquisition_size)
    assert 1 <= k <= n, "acquisition_size must be in [1, N]"
    assert k <= LANE, "running top-k is stored lane-dense (k <= 128)"

    rows_total = -(-n // LANE)                                   # ceil(N / 128)
    tr = min(int(tile_rows), _round_up(rows_total, SUB))
    tr = max(SUB, (tr // SUB) * SUB)                             # tile rows: multiple of 8
    num_tiles = -(-rows_total // tr)
    rows_pad = num_tiles * tr
    pad = rows_pad * LANE - n

    def prep(x):
        x = x.reshape(n).astype(jnp.float32)
        return jnp.pad(x, (0, pad)).reshape(rows_pad, LANE)      # dense sublane x lane layout

    loc_p, scale_p, eps_p = prep(loc), prep(scale), prep(eps)

    kernel = _make_kernel(n, k, tr)

    out = pl.pallas_call(
        kernel,
        out_shape=jax.ShapeDtypeStruct((SUB, LANE), jnp.int32),
        grid_spec=pltpu.PrefetchScalarGridSpec(
            num_scalar_prefetch=0,
            grid=(num_tiles,),
            in_specs=[pl.BlockSpec((tr, LANE), lambda i: (i, 0)) for _ in range(3)],
            out_specs=pl.BlockSpec((SUB, LANE), lambda i: (0, 0)),   # resident index carry
            scratch_shapes=[
                pltpu.VMEM((SUB, LANE), jnp.float32),   # running top-k values
                pltpu.VMEM((tr, LANE), jnp.float32),    # per-tile work values
                pltpu.VMEM((tr, LANE), jnp.int32),      # per-tile work (flat) indices
            ],
        ),
        compiler_params=pltpu.CompilerParams(
            dimension_semantics=("arbitrary",),   # sequential reduction with a carry
        ),
    )(loc_p, scale_p, eps_p)

    # torch.topk returns int64 indices; int32 is sufficient for N < 2**31.
    return out[0, :k]


if __name__ == "__main__":
    key = jax.random.PRNGKey(0)

    def run_case(n, k, tile_rows, case_key):
        k_loc, k_scale, k_eps = jax.random.split(case_key, 3)
        # Deterministic "distribution" parameters (e.g. GP posterior mean / stddev).
        loc = jax.random.normal(k_loc, (n,), dtype=jnp.float32)
        scale = 0.1 + jax.nn.softplus(jax.random.normal(k_scale, (n,), dtype=jnp.float32))
        eps = jax.random.normal(k_eps, (n,), dtype=jnp.float32)   # distribution.sample() noise

        idxs = thompson_sampling(loc, scale, eps, acquisition_size=k, tile_rows=tile_rows)
        idxs = jax.block_until_ready(idxs)

        # Reference (pure JAX): same reparameterized sample, lax.top_k.
        sample_ref = loc + scale * eps
        _, ref_idxs = lax.top_k(sample_ref, k)
        assert idxs.shape == (k,)
        assert jnp.array_equal(idxs, ref_idxs.astype(jnp.int32)), (n, k, idxs, ref_idxs)

    keys = jax.random.split(key, 3)
    run_case(2000, 4, 8, keys[0])     # 2 grid tiles, unrolled chunk fold, padded last tile
    run_case(300, 3, 1024, keys[1])   # single tile, heavy padding
    run_case(8292, 5, 64, keys[2])    # 2 tiles, rolled (fori_loop) chunk fold

    print("KERNEL_OK")
</pallas_src>

<mosaic_0001>
module attributes {stable_mosaic.version = 11 : i64} {
  func.func @kernel(%arg0: i32, %arg1: memref<8x128xf32, #tpu.memory_space<vmem>>, %arg2: memref<8x128xf32, #tpu.memory_space<vmem>>, %arg3: memref<8x128xf32, #tpu.memory_space<vmem>>, %arg4: memref<8x128xi32, #tpu.memory_space<vmem>>, %arg5: memref<8x128xf32, #tpu.memory_space<vmem>>, %arg6: memref<8x128xf32, #tpu.memory_space<vmem>>, %arg7: memref<8x128xi32, #tpu.memory_space<vmem>>) attributes {dimension_semantics = [#tpu.dimension_semantics<arbitrary>], iteration_bounds = array<i64: 2>, scalar_prefetch = 0 : i64, scratch_operands = 3 : i64, tpu.core_type = #tpu.core_type<tc>, window_params = [{transform_indices = @transform_0, window_bounds = array<i64: 8, 128>}, {transform_indices = @transform_1, window_bounds = array<i64: 8, 128>}, {transform_indices = @transform_2, window_bounds = array<i64: 8, 128>}, {pipeline_mode = #tpu.pipeline_mode<synchronous>, transform_indices = @transform_3, window_bounds = array<i64: 8, 128>}]} {
    %0 = tpu.iota {dimensions = array<i32: 0>} : vector<8x128xi32>
    %1 = tpu.iota {dimensions = array<i32: 1>} : vector<8x128xi32>
    %cst = arith.constant 0xFF800000 : f32
    %2 = vector.broadcast %cst : f32 to vector<8x128xf32>
    %c2147483647_i32 = arith.constant 2147483647 : i32
    %3 = vector.broadcast %c2147483647_i32 : i32 to vector<8x128xi32>
    %cst_0 = arith.constant 0xFF800000 : f32
    %4 = vector.broadcast %cst_0 : f32 to vector<8x128xf32>
    %c2147483647_i32_1 = arith.constant 2147483647 : i32
    %5 = vector.broadcast %c2147483647_i32_1 : i32 to vector<8x128xi32>
    %6 = tpu.iota {dimensions = array<i32: 0>} : vector<8x128xi32>
    %7 = tpu.iota {dimensions = array<i32: 1>} : vector<8x128xi32>
    %c0_i32 = arith.constant 0 : i32
    %8 = arith.cmpi eq, %arg0, %c0_i32 : i32
    %9 = arith.extui %8 : i1 to i32
    %c0_i32_2 = arith.constant 0 : i32
    %10 = arith.cmpi ne, %9, %c0_i32_2 : i32
    scf.if %10 {
      %c0_73 = arith.constant 0 : index
      %c0_74 = arith.constant 0 : index
      %196 = vector.load %arg5[%c0_73, %c0_74] : memref<8x128xf32, #tpu.memory_space<vmem>>, vector<8x128xf32>
      tpu.vector_store %arg5[%c0_73, %c0_74], %4 {strides = array<i32>} : memref<8x128xf32, #tpu.memory_space<vmem>>, vector<8x128xf32>,
      %c0_75 = arith.constant 0 : index
      %c0_76 = arith.constant 0 : index
      %197 = vector.load %arg4[%c0_75, %c0_76] : memref<8x128xi32, #tpu.memory_space<vmem>>, vector<8x128xi32>
      tpu.vector_store %arg4[%c0_75, %c0_76], %5 {strides = array<i32>} : memref<8x128xi32, #tpu.memory_space<vmem>>, vector<8x128xi32>,
    } else {
    }
    %c0 = arith.constant 0 : index
    %c0_3 = arith.constant 0 : index
    %11 = vector.load %arg1[%c0, %c0_3] : memref<8x128xf32, #tpu.memory_space<vmem>>, vector<8x128xf32>
    %c0_4 = arith.constant 0 : index
    %c0_5 = arith.constant 0 : index
    %12 = vector.load %arg2[%c0_4, %c0_5] : memref<8x128xf32, #tpu.memory_space<vmem>>, vector<8x128xf32>
    %c0_6 = arith.constant 0 : index
    %c0_7 = arith.constant 0 : index
    %13 = vector.load %arg3[%c0_6, %c0_7] : memref<8x128xf32, #tpu.memory_space<vmem>>, vector<8x128xf32>
    %14 = arith.mulf %12, %13 : vector<8x128xf32>
    %15 = arith.addf %11, %14 : vector<8x128xf32>
    %c8_i32 = arith.constant 8 : i32
    %16 = arith.muli %arg0, %c8_i32 : i32
    %17 = vector.broadcast %16 : i32 to vector<8x128xi32>
    %18 = arith.addi %17, %0 : vector<8x128xi32>
    %c128_i32 = arith.constant 128 : i32
    %19 = vector.broadcast %c128_i32 : i32 to vector<8x128xi32>
    %20 = arith.muli %18, %19 : vector<8x128xi32>
    %21 = arith.addi %20, %1 : vector<8x128xi32>
    %c2000_i32 = arith.constant 2000 : i32
    %22 = vector.broadcast %c2000_i32 : i32 to vector<8x128xi32>
    %23 = arith.cmpi slt, %21, %22 : vector<8x128xi32>
    %24 = arith.select %23, %15, %2 : vector<8x128xi1>, vector<8x128xf32>
    %c0_8 = arith.constant 0 : index
    %c0_9 = arith.constant 0 : index
    %25 = vector.load %arg6[%c0_8, %c0_9] : memref<8x128xf32, #tpu.memory_space<vmem>>, vector<8x128xf32>
    tpu.vector_store %arg6[%c0_8, %c0_9], %24 {strides = array<i32>} : memref<8x128xf32, #tpu.memory_space<vmem>>, vector<8x128xf32>,
    %26 = arith.select %23, %21, %3 : vector<8x128xi1>, vector<8x128xi32>
    %c0_10 = arith.constant 0 : index
    %c0_11 = arith.constant 0 : index
    %27 = vector.load %arg7[%c0_10, %c0_11] : memref<8x128xi32, #tpu.memory_space<vmem>>, vector<8x128xi32>
    tpu.vector_store %arg7[%c0_10, %c0_11], %26 {strides = array<i32>} : memref<8x128xi32, #tpu.memory_space<vmem>>, vector<8x128xi32>,
    %c0_12 = arith.constant 0 : index
    %c0_13 = arith.constant 0 : index
    %28 = vector.load %arg5[%c0_12, %c0_13] : memref<8x128xf32, #tpu.memory_space<vmem>>, vector<8x128xf32>
    %c0_14 = arith.constant 0 : index
    %c0_15 = arith.constant 0 : index
    %29 = vector.load %arg4[%c0_14, %c0_15] : memref<8x128xi32, #tpu.memory_space<vmem>>, vector<8x128xi32>
    %c0_16 = arith.constant 0 : index
    %c0_17 = arith.constant 0 : index
    %30 = vector.load %arg6[%c0_16, %c0_17] : memref<8x128xf32, #tpu.memory_space<vmem>>, vector<8x128xf32>
    %c0_18 = arith.constant 0 : index
    %c0_19 = arith.constant 0 : index
    %31 = vector.load %arg7[%c0_18, %c0_19] : memref<8x128xi32, #tpu.memory_space<vmem>>, vector<8x128xi32>
    %32 = arith.cmpf ogt, %30, %28 : vector<8x128xf32>
    %33 = arith.maximumf %28, %30 : vector<8x128xf32>
    %34 = arith.select %32, %31, %29 : vector<8x128xi1>, vector<8x128xi32>
    %35 = vector.shape_cast %33 : vector<8x128xf32> to vector<1x8x128xf32>
    %cst_20 = arith.constant dense<0xFF800000> : vector<1xf32>
    %36 = vector.multi_reduction <maximumf>, %35, %cst_20 [1, 2] : vector<1x8x128xf32> to vector<1xf32>
    %37 = vector.shape_cast %36 : vector<1xf32> to vector<1x1x1xf32>
    %38 = vector.extract %37[0, 0, 0] : f32 from vector<1x1x1xf32>
    %39 = vector.broadcast %38 : f32 to vector<1x1xf32>
    %40 = vector.broadcast %39 : vector<1x1xf32> to vector<8x128xf32>
    %41 = arith.cmpf oge, %33, %40 : vector<8x128xf32>
    %42 = arith.select %41, %34, %5 : vector<8x128xi1>, vector<8x128xi32>
    %43 = vector.shape_cast %42 : vector<8x128xi32> to vector<1x8x128xi32>
    %cst_21 = arith.constant dense<2147483647> : vector<1xi32>
    %44 = vector.multi_reduction <minsi>, %43, %cst_21 [1, 2] : vector<1x8x128xi32> to vector<1xi32>
    %45 = vector.shape_cast %44 : vector<1xi32> to vector<1x1x1xi32>
    %46 = vector.extract %45[0, 0, 0] : i32 from vector<1x1x1xi32>
    %47 = vector.broadcast %46 : i32 to vector<1x1xi32>
    %c0_i32_22 = arith.constant 0 : i32
    %48 = vector.broadcast %c0_i32_22 : i32 to vector<8x128xi32>
    %49 = arith.cmpi eq, %6, %48 : vector<8x128xi32>
    %c0_i32_23 = arith.constant 0 : i32
    %50 = vector.broadcast %c0_i32_23 : i32 to vector<8x128xi32>
    %51 = arith.cmpi eq, %7, %50 : vector<8x128xi32>
    %52 = arith.andi %49, %51 : vector<8x128xi1>
    %53 = vector.shape_cast %39 : vector<1x1xf32> to vector<1x1xf32>
    %54 = vector.broadcast %53 : vector<1x1xf32> to vector<8x128xf32>
    %55 = arith.select %52, %54, %4 : vector<8x128xi1>, vector<8x128xf32>
    %56 = vector.shape_cast %47 : vector<1x1xi32> to vector<1x1xi32>
    %57 = vector.broadcast %56 : vector<1x1xi32> to vector<8x128xi32>
    %58 = arith.select %52, %57, %5 : vector<8x128xi1>, vector<8x128xi32>
    %59 = vector.broadcast %47 : vector<1x1xi32> to vector<8x128xi32>
    %60 = arith.cmpi eq, %29, %59 : vector<8x128xi32>
    %61 = arith.select %60, %4, %28 : vector<8x128xi1>, vector<8x128xf32>
    %62 = vector.broadcast %47 : vector<1x1xi32> to vector<8x128xi32>
    %63 = arith.cmpi eq, %29, %62 : vector<8x128xi32>
    %64 = arith.select %63, %5, %29 : vector<8x128xi1>, vector<8x128xi32>
    %c0_24 = arith.constant 0 : index
    %c0_25 = arith.constant 0 : index
    %65 = vector.load %arg7[%c0_24, %c0_25] : memref<8x128xi32, #tpu.memory_space<vmem>>, vector<8x128xi32>
    %66 = vector.broadcast %47 : vector<1x1xi32> to vector<8x128xi32>
    %67 = arith.cmpi eq, %65, %66 : vector<8x128xi32>
    %c0_26 = arith.constant 0 : index
    %c0_27 = arith.constant 0 : index
    %68 = vector.load %arg6[%c0_26, %c0_27] : memref<8x128xf32, #tpu.memory_space<vmem>>, vector<8x128xf32>
    %69 = arith.select %67, %2, %68 : vector<8x128xi1>, vector<8x128xf32>
    %c0_28 = arith.constant 0 : index
    %c0_29 = arith.constant 0 : index
    %70 = vector.load %arg6[%c0_28, %c0_29] : memref<8x128xf32, #tpu.memory_space<vmem>>, vector<8x128xf32>
    tpu.vector_store %arg6[%c0_28, %c0_29], %69 {strides = array<i32>} : memref<8x128xf32, #tpu.memory_space<vmem>>, vector<8x128xf32>,
    %71 = vector.broadcast %47 : vector<1x1xi32> to vector<8x128xi32>
    %72 = arith.cmpi eq, %65, %71 : vector<8x128xi32>
    %73 = arith.select %72, %3, %65 : vector<8x128xi1>, vector<8x128xi32>
    %c0_30 = arith.constant 0 : index
    %c0_31 = arith.constant 0 : index
    %74 = vector.load %arg7[%c0_30, %c0_31] : memref<8x128xi32, #tpu.memory_space<vmem>>, vector<8x128xi32>
    tpu.vector_store %arg7[%c0_30, %c0_31], %73 {strides = array<i32>} : memref<8x128xi32, #tpu.memory_space<vmem>>, vector<8x128xi32>,
    %c0_32 = arith.constant 0 : index
    %c0_33 = arith.constant 0 : index
    %75 = vector.load %arg6[%c0_32, %c0_33] : memref<8x128xf32, #tpu.memory_space<vmem>>, vector<8x128xf32>
    %c0_34 = arith.constant 0 : index
    %c0_35 = arith.constant 0 : index
    %76 = vector.load %arg7[%c0_34, %c0_35] : memref<8x128xi32, #tpu.memory_space<vmem>>, vector<8x128xi32>
    %77 = arith.cmpf ogt, %75, %61 : vector<8x128xf32>
    %78 = arith.maximumf %61, %75 : vector<8x128xf32>
    %79 = arith.select %77, %76, %64 : vector<8x128xi1>, vector<8x128xi32>
    %80 = vector.shape_cast %78 : vector<8x128xf32> to vector<1x8x128xf32>
    %cst_36 = arith.constant dense<0xFF800000> : vector<1xf32>
    %81 = vector.multi_reduction <maximumf>, %80, %cst_36 [1, 2] : vector<1x8x128xf32> to vector<1xf32>
    %82 = vector.shape_cast %81 : vector<1xf32> to vector<1x1x1xf32>
    %83 = vector.extract %82[0, 0, 0] : f32 from vector<1x1x1xf32>
    %84 = vector.broadcast %83 : f32 to vector<1x1xf32>
    %85 = vector.broadcast %84 : vector<1x1xf32> to vector<8x128xf32>
    %86 = arith.cmpf oge, %78, %85 : vector<8x128xf32>
    %87 = arith.select %86, %79, %5 : vector<8x128xi1>, vector<8x128xi32>
    %88 = vector.shape_cast %87 : vector<8x128xi32> to vector<1x8x128xi32>
    %cst_37 = arith.constant dense<2147483647> : vector<1xi32>
    %89 = vector.multi_reduction <minsi>, %88, %cst_37 [1, 2] : vector<1x8x128xi32> to vector<1xi32>
    %90 = vector.shape_cast %89 : vector<1xi32> to vector<1x1x1xi32>
    %91 = vector.extract %90[0, 0, 0] : i32 from vector<1x1x1xi32>
    %92 = vector.broadcast %91 : i32 to vector<1x1xi32>
    %c0_i32_38 = arith.constant 0 : i32
    %93 = vector.broadcast %c0_i32_38 : i32 to vector<8x128xi32>
    %94 = arith.cmpi eq, %6, %93 : vector<8x128xi32>
    %c1_i32 = arith.constant 1 : i32
    %95 = vector.broadcast %c1_i32 : i32 to vector<8x128xi32>
    %96 = arith.cmpi eq, %7, %95 : vector<8x128xi32>
    %97 = arith.andi %94, %96 : vector<8x128xi1>
    %98 = vector.shape_cast %84 : vector<1x1xf32> to vector<1x1xf32>
    %99 = vector.broadcast %98 : vector<1x1xf32> to vector<8x128xf32>
    %100 = arith.select %97, %99, %55 : vector<8x128xi1>, vector<8x128xf32>
    %101 = vector.shape_cast %92 : vector<1x1xi32> to vector<1x1xi32>
    %102 = vector.broadcast %101 : vector<1x1xi32> to vector<8x128xi32>
    %103 = arith.select %97, %102, %58 : vector<8x128xi1>, vector<8x128xi32>
    %104 = vector.broadcast %92 : vector<1x1xi32> to vector<8x128xi32>
    %105 = arith.cmpi eq, %64, %104 : vector<8x128xi32>
    %106 = arith.select %105, %4, %61 : vector<8x128xi1>, vector<8x128xf32>
    %107 = vector.broadcast %92 : vector<1x1xi32> to vector<8x128xi32>
    %108 = arith.cmpi eq, %64, %107 : vector<8x128xi32>
    %109 = arith.select %108, %5, %64 : vector<8x128xi1>, vector<8x128xi32>
    %c0_39 = arith.constant 0 : index
    %c0_40 = arith.constant 0 : index
    %110 = vector.load %arg7[%c0_39, %c0_40] : memref<8x128xi32, #tpu.memory_space<vmem>>, vector<8x128xi32>
    %111 = vector.broadcast %92 : vector<1x1xi32> to vector<8x128xi32>
    %112 = arith.cmpi eq, %110, %111 : vector<8x128xi32>
    %c0_41 = arith.constant 0 : index
    %c0_42 = arith.constant 0 : index
    %113 = vector.load %arg6[%c0_41, %c0_42] : memref<8x128xf32, #tpu.memory_space<vmem>>, vector<8x128xf32>
    %114 = arith.select %112, %2, %113 : vector<8x128xi1>, vector<8x128xf32>
    %c0_43 = arith.constant 0 : index
    %c0_44 = arith.constant 0 : index
    %115 = vector.load %arg6[%c0_43, %c0_44] : memref<8x128xf32, #tpu.memory_space<vmem>>, vector<8x128xf32>
    tpu.vector_store %arg6[%c0_43, %c0_44], %114 {strides = array<i32>} : memref<8x128xf32, #tpu.memory_space<vmem>>, vector<8x128xf32>,
    %116 = vector.broadcast %92 : vector<1x1xi32> to vector<8x128xi32>
    %117 = arith.cmpi eq, %110, %116 : vector<8x128xi32>
    %118 = arith.select %117, %3, %110 : vector<8x128xi1>, vector<8x128xi32>
    %c0_45 = arith.constant 0 : index
    %c0_46 = arith.constant 0 : index
    %119 = vector.load %arg7[%c0_45, %c0_46] : memref<8x128xi32, #tpu.memory_space<vmem>>, vector<8x128xi32>
    tpu.vector_store %arg7[%c0_45, %c0_46], %118 {strides = array<i32>} : memref<8x128xi32, #tpu.memory_space<vmem>>, vector<8x128xi32>,
    %c0_47 = arith.constant 0 : index
    %c0_48 = arith.constant 0 : index
    %120 = vector.load %arg6[%c0_47, %c0_48] : memref<8x128xf32, #tpu.memory_space<vmem>>, vector<8x128xf32>
    %c0_49 = arith.constant 0 : index
    %c0_50 = arith.constant 0 : index
    %121 = vector.load %arg7[%c0_49, %c0_50] : memref<8x128xi32, #tpu.memory_space<vmem>>, vector<8x128xi32>
    %122 = arith.cmpf ogt, %120, %106 : vector<8x128xf32>
    %123 = arith.maximumf %106, %120 : vector<8x128xf32>
    %124 = arith.select %122, %121, %109 : vector<8x128xi1>, vector<8x128xi32>
    %125 = vector.shape_cast %123 : vector<8x128xf32> to vector<1x8x128xf32>
    %cst_51 = arith.constant dense<0xFF800000> : vector<1xf32>
    %126 = vector.multi_reduction <maximumf>, %125, %cst_51 [1, 2] : vector<1x8x128xf32> to vector<1xf32>
    %127 = vector.shape_cast %126 : vector<1xf32> to vector<1x1x1xf32>
    %128 = vector.extract %127[0, 0, 0] : f32 from vector<1x1x1xf32>
    %129 = vector.broadcast %128 : f32 to vector<1x1xf32>
    %130 = vector.broadcast %129 : vector<1x1xf32> to vector<8x128xf32>
    %131 = arith.cmpf oge, %123, %130 : vector<8x128xf32>
    %132 = arith.select %131, %124, %5 : vector<8x128xi1>, vector<8x128xi32>
    %133 = vector.shape_cast %132 : vector<8x128xi32> to vector<1x8x128xi32>
    %cst_52 = arith.constant dense<2147483647> : vector<1xi32>
    %134 = vector.multi_reduction <minsi>, %133, %cst_52 [1, 2] : vector<1x8x128xi32> to vector<1xi32>
    %135 = vector.shape_cast %134 : vector<1xi32> to vector<1x1x1xi32>
    %136 = vector.extract %135[0, 0, 0] : i32 from vector<1x1x1xi32>
    %137 = vector.broadcast %136 : i32 to vector<1x1xi32>
    %c0_i32_53 = arith.constant 0 : i32
    %138 = vector.broadcast %c0_i32_53 : i32 to vector<8x128xi32>
    %139 = arith.cmpi eq, %6, %138 : vector<8x128xi32>
    %c2_i32 = arith.constant 2 : i32
    %140 = vector.broadcast %c2_i32 : i32 to vector<8x128xi32>
    %141 = arith.cmpi eq, %7, %140 : vector<8x128xi32>
    %142 = arith.andi %139, %141 : vector<8x128xi1>
    %143 = vector.shape_cast %129 : vector<1x1xf32> to vector<1x1xf32>
    %144 = vector.broadcast %143 : vector<1x1xf32> to vector<8x128xf32>
    %145 = arith.select %142, %144, %100 : vector<8x128xi1>, vector<8x128xf32>
    %146 = vector.shape_cast %137 : vector<1x1xi32> to vector<1x1xi32>
    %147 = vector.broadcast %146 : vector<1x1xi32> to vector<8x128xi32>
    %148 = arith.select %142, %147, %103 : vector<8x128xi1>, vector<8x128xi32>
    %149 = vector.broadcast %137 : vector<1x1xi32> to vector<8x128xi32>
    %150 = arith.cmpi eq, %109, %149 : vector<8x128xi32>
    %151 = arith.select %150, %4, %106 : vector<8x128xi1>, vector<8x128xf32>
    %152 = vector.broadcast %137 : vector<1x1xi32> to vector<8x128xi32>
    %153 = arith.cmpi eq, %109, %152 : vector<8x128xi32>
    %154 = arith.select %153, %5, %109 : vector<8x128xi1>, vector<8x128xi32>
    %c0_54 = arith.constant 0 : index
    %c0_55 = arith.constant 0 : index
    %155 = vector.load %arg7[%c0_54, %c0_55] : memref<8x128xi32, #tpu.memory_space<vmem>>, vector<8x128xi32>
    %156 = vector.broadcast %137 : vector<1x1xi32> to vector<8x128xi32>
    %157 = arith.cmpi eq, %155, %156 : vector<8x128xi32>
    %c0_56 = arith.constant 0 : index
    %c0_57 = arith.constant 0 : index
    %158 = vector.load %arg6[%c0_56, %c0_57] : memref<8x128xf32, #tpu.memory_space<vmem>>, vector<8x128xf32>
    %159 = arith.select %157, %2, %158 : vector<8x128xi1>, vector<8x128xf32>
    %c0_58 = arith.constant 0 : index
    %c0_59 = arith.constant 0 : index
    %160 = vector.load %arg6[%c0_58, %c0_59] : memref<8x128xf32, #tpu.memory_space<vmem>>, vector<8x128xf32>
    tpu.vector_store %arg6[%c0_58, %c0_59], %159 {strides = array<i32>} : memref<8x128xf32, #tpu.memory_space<vmem>>, vector<8x128xf32>,
    %161 = vector.broadcast %137 : vector<1x1xi32> to vector<8x128xi32>
    %162 = arith.cmpi eq, %155, %161 : vector<8x128xi32>
    %163 = arith.select %162, %3, %155 : vector<8x128xi1>, vector<8x128xi32>
    %c0_60 = arith.constant 0 : index
    %c0_61 = arith.constant 0 : index
    %164 = vector.load %arg7[%c0_60, %c0_61] : memref<8x128xi32, #tpu.memory_space<vmem>>, vector<8x128xi32>
    tpu.vector_store %arg7[%c0_60, %c0_61], %163 {strides = array<i32>} : memref<8x128xi32, #tpu.memory_space<vmem>>, vector<8x128xi32>,
    %c0_62 = arith.constant 0 : index
    %c0_63 = arith.constant 0 : index
    %165 = vector.load %arg6[%c0_62, %c0_63] : memref<8x128xf32, #tpu.memory_space<vmem>>, vector<8x128xf32>
    %c0_64 = arith.constant 0 : index
    %c0_65 = arith.constant 0 : index
    %166 = vector.load %arg7[%c0_64, %c0_65] : memref<8x128xi32, #tpu.memory_space<vmem>>, vector<8x128xi32>
    %167 = arith.cmpf ogt, %165, %151 : vector<8x128xf32>
    %168 = arith.maximumf %151, %165 : vector<8x128xf32>
    %169 = arith.select %167, %166, %154 : vector<8x128xi1>, vector<8x128xi32>
    %170 = vector.shape_cast %168 : vector<8x128xf32> to vector<1x8x128xf32>
    %cst_66 = arith.constant dense<0xFF800000> : vector<1xf32>
    %171 = vector.multi_reduction <maximumf>, %170, %cst_66 [1, 2] : vector<1x8x128xf32> to vector<1xf32>
    %172 = vector.shape_cast %171 : vector<1xf32> to vector<1x1x1xf32>
    %173 = vector.extract %172[0, 0, 0] : f32 from vector<1x1x1xf32>
    %174 = vector.broadcast %173 : f32 to vector<1x1xf32>
    %175 = vector.broadcast %174 : vector<1x1xf32> to vector<8x128xf32>
    %176 = arith.cmpf oge, %168, %175 : vector<8x128xf32>
    %177 = arith.select %176, %169, %5 : vector<8x128xi1>, vector<8x128xi32>
    %178 = vector.shape_cast %177 : vector<8x128xi32> to vector<1x8x128xi32>
    %cst_67 = arith.constant dense<2147483647> : vector<1xi32>
    %179 = vector.multi_reduction <minsi>, %178, %cst_67 [1, 2] : vector<1x8x128xi32> to vector<1xi32>
    %180 = vector.shape_cast %179 : vector<1xi32> to vector<1x1x1xi32>
    %181 = vector.extract %180[0, 0, 0] : i32 from vector<1x1x1xi32>
    %182 = vector.broadcast %181 : i32 to vector<1x1xi32>
    %c0_i32_68 = arith.constant 0 : i32
    %183 = vector.broadcast %c0_i32_68 : i32 to vector<8x128xi32>
    %184 = arith.cmpi eq, %6, %183 : vector<8x128xi32>
    %c3_i32 = arith.constant 3 : i32
    %185 = vector.broadcast %c3_i32 : i32 to vector<8x128xi32>
    %186 = arith.cmpi eq, %7, %185 : vector<8x128xi32>
    %187 = arith.andi %184, %186 : vector<8x128xi1>
    %188 = vector.shape_cast %174 : vector<1x1xf32> to vector<1x1xf32>
    %189 = vector.broadcast %188 : vector<1x1xf32> to vector<8x128xf32>
    %190 = arith.select %187, %189, %145 : vector<8x128xi1>, vector<8x128xf32>
    %191 = vector.shape_cast %182 : vector<1x1xi32> to vector<1x1xi32>
    %192 = vector.broadcast %191 : vector<1x1xi32> to vector<8x128xi32>
    %193 = arith.select %187, %192, %148 : vector<8x128xi1>, vector<8x128xi32>
    %c0_69 = arith.constant 0 : index
    %c0_70 = arith.constant 0 : index
    %194 = vector.load %arg5[%c0_69, %c0_70] : memref<8x128xf32, #tpu.memory_space<vmem>>, vector<8x128xf32>
    tpu.vector_store %arg5[%c0_69, %c0_70], %190 {strides = array<i32>} : memref<8x128xf32, #tpu.memory_space<vmem>>, vector<8x128xf32>,
    %c0_71 = arith.constant 0 : index
    %c0_72 = arith.constant 0 : index
    %195 = vector.load %arg4[%c0_71, %c0_72] : memref<8x128xi32, #tpu.memory_space<vmem>>, vector<8x128xi32>
    tpu.vector_store %arg4[%c0_71, %c0_72], %193 {strides = array<i32>} : memref<8x128xi32, #tpu.memory_space<vmem>>, vector<8x128xi32>,
    return
  }
  func.func @transform_0(%arg0: i32) -> (i32, i32) {
    %c0_i32 = arith.constant 0 : i32
    %c0_i32_0 = arith.constant 0 : i32
    return %arg0, %c0_i32 : i32, i32
  }
  func.func @transform_1(%arg0: i32) -> (i32, i32) {
    %c0_i32 = arith.constant 0 : i32
    %c0_i32_0 = arith.constant 0 : i32
    return %arg0, %c0_i32 : i32, i32
  }
  func.func @transform_2(%arg0: i32) -> (i32, i32) {
    %c0_i32 = arith.constant 0 : i32
    %c0_i32_0 = arith.constant 0 : i32
    return %arg0, %c0_i32 : i32, i32
  }
  func.func @transform_3(%arg0: i32) -> (i32, i32) {
    %c0_i32 = arith.constant 0 : i32
    %c0_i32_0 = arith.constant 0 : i32
    %c0_i32_1 = arith.constant 0 : i32
    return %c0_i32, %c0_i32_0 : i32, i32
  }
}

</mosaic_0001>

<llo_original>
// kernel: tpu_custom_call.1
$region0: #{tpu_custom_call.1}
  #allocation0 [shape = 'u32[]', space=smem, size = 0x4, offset = 0x4, fixed_abs, tag = 'smem constant byte address 0x4 - core index']
  #allocation1 [shape = 'u32[144,128]{1,0:T(1,128)}', space=vmem, size = 0x12000, scoped, tag = 'internal scratch']
  #allocation2 [shape = 'f32[8,128]{1,0:T(8,128)}', space=vmem, size = 0x1000, scoped, tag = 'scratch operand']
  #allocation3 [shape = 'f32[8,128]{1,0:T(8,128)}', space=vmem, size = 0x1000, scoped, tag = 'scratch operand']
  #allocation4 [shape = 's32[8,128]{1,0:T(8,128)}', space=vmem, size = 0x1000, scoped, tag = 'scratch operand']
  %s0 = inlined_call_operand.hbm [shape: f32[16,128], index: 0, kind: input, shape index: {}]
  %s1 = inlined_call_operand.hbm [shape: f32[16,128], index: 1, kind: input, shape index: {}]
  %s2 = inlined_call_operand.hbm [shape: f32[16,128], index: 2, kind: input, shape index: {}]
  %s3 = inlined_call_operand.hbm [shape: s32[8,128], index: 3, kind: output, shape index: {}]
  %s4 = sld [smem:[#allocation0]]
  $region61: #{tpu_custom_call.1} parent=0
    _
  %s6 = ssub.s32 1, %s4
  %s7 = scalar_select 0, %s6, %s4
  $region1: #{tpu_custom_call.1} parent=0
    #allocation5 [shape = 'u8[8192]{0}', space=vmem, size = 0x2000, scoped, tag = 'input window, operand 0']
    #allocation6 [shape = 's32[2]{0}', space=sflag, size = 0x8, scoped, tag = 'scoped memory for tpu_custom_call.1']
    #allocation7 [shape = 's32[2]{0}', space=sflag, size = 0x8, scoped, tag = 'scoped memory for tpu_custom_call.1']
    #allocation8 [shape = 'u8[8192]{0}', space=vmem, size = 0x2000, scoped, tag = 'input window, operand 1']
    #allocation9 [shape = 's32[2]{0}', space=sflag, size = 0x8, scoped, tag = 'scoped memory for tpu_custom_call.1']
    #allocation10 [shape = 'u8[8192]{0}', space=vmem, size = 0x2000, scoped, tag = 'input window, operand 2']
    #allocation11 [shape = 'u8[4096]{0}', space=vmem, size = 0x1000, scoped, tag = 'output window, operand 0, single buffered']
    %8 = vsyncpa [#allocation6], 0
    %s9 = scalar_lea.sflag [#allocation6], 1
    %10 = vsyncpa %s9, 0
    %11 = vsyncpa [#allocation9], 0
    %s12 = scalar_lea.sflag [#allocation9], 1
    %13 = vsyncpa %s12, 0
    %14 = vsyncpa [#allocation7], 0
    loop: start=0, step=1, limit=4
    $region2: #{tpu_custom_call.1} parent=1 // loop_pre_header
      _
    $region3: #{tpu_custom_call.1} parent=1 // loop_header
      %s16 = sphi 0, %s20
      %p17 = scmp.ge.s32.totalorder %s16, 4
      %s26 = sphi 0, %s28
      %s29 = sphi 0, %s26
      %s30 = sphi 0, %s29
      %s46 = sphi 0, %s30
      %s52 = sphi 0, %s54
      %s55 = sphi 0, %s52
      %s56 = sphi 0, %s55
      %s72 = sphi 0, %s56
      %s78 = sphi 0, %s80
      %s81 = sphi 0, %s78
      %s82 = sphi 0, %s81
      %s98 = sphi 0, %s82
      %s102 = sphi 0, %s102
      %s104 = sphi 0, %s102
      %s105 = sphi 0, %s104
      %s119 = sphi 0, %s105
    $region4: #{tpu_custom_call.1} parent=1 // loop_header_branch
      %19 = sbr.rel (%p17) target = $region8
    $region5: #{tpu_custom_call.1} parent=1 // loop_body
      %s21 = ssub.s32 %s16, 1
      %s22 = ssub.s32 %s16, 2
      %s23 = sadd.s32 %s16, 1
      %s24 = ssub.s32 %s16, %s23
      %p25 = scmp.eq.s32.totalorder %s24, 0
      %s27 = sadd.s32 %s26, 1
      %s28 = scalar_select %p25, %s26, %s27
      %p31 = pneg %p25
      %p32 = scmp.eq.s32.totalorder %s16, 1
      %p33 = por %p31, %p32
      %p34 = scmp.ne.s32.totalorder %s26, %s29
      %p35 = scmp.eq.s32.totalorder %s16, 0
      %p36 = por %p34, %p35
      %p37 = scmp.ne.s32.totalorder %s26, %s29
      %p38 = scmp.eq.s32.totalorder %s21, 1
      %p39 = por %p37, %p38
      %p40 = scmp.ne.s32.totalorder %s29, %s30
      %p41 = scmp.eq.s32.totalorder %s21, 0
      %p42 = por %p40, %p41
      %p43 = scmp.ne.s32.totalorder %s29, %s30
      %p44 = scmp.eq.s32.totalorder %s22, 1
      %p45 = por %p43, %p44
      %p47 = scmp.ne.s32.totalorder %s30, %s46
      %p48 = scmp.eq.s32.totalorder %s22, 0
      %p49 = por %p47, %p48
      %s50 = ssub.s32 %s16, %s23
      %p51 = scmp.eq.s32.totalorder %s50, 0
      %s53 = sadd.s32 %s52, 1
      %s54 = scalar_select %p51, %s52, %s53
      %p57 = pneg %p51
      %p58 = scmp.eq.s32.totalorder %s16, 1
      %p59 = por %p57, %p58
      %p60 = scmp.ne.s32.totalorder %s52, %s55
      %p61 = scmp.eq.s32.totalorder %s16, 0
      %p62 = por %p60, %p61
      %p63 = scmp.ne.s32.totalorder %s52, %s55
      %p64 = scmp.eq.s32.totalorder %s21, 1
      %p65 = por %p63, %p64
      %p66 = scmp.ne.s32.totalorder %s55, %s56
      %p67 = scmp.eq.s32.totalorder %s21, 0
      %p68 = por %p66, %p67
      %p69 = scmp.ne.s32.totalorder %s55, %s56
      %p70 = scmp.eq.s32.totalorder %s22, 1
      %p71 = por %p69, %p70
      %p73 = scmp.ne.s32.totalorder %s56, %s72
      %p74 = scmp.eq.s32.totalorder %s22, 0
      %p75 = por %p73, %p74
      %s76 = ssub.s32 %s16, %s23
      %p77 = scmp.eq.s32.totalorder %s76, 0
      %s79 = sadd.s32 %s78, 1
      %s80 = scalar_select %p77, %s78, %s79
      %p83 = pneg %p77
      %p84 = scmp.eq.s32.totalorder %s16, 1
      %p85 = por %p83, %p84
      %p86 = scmp.ne.s32.totalorder %s78, %s81
      %p87 = scmp.eq.s32.totalorder %s16, 0
      %p88 = por %p86, %p87
      %p89 = scmp.ne.s32.totalorder %s78, %s81
      %p90 = scmp.eq.s32.totalorder %s21, 1
      %p91 = por %p89, %p90
      %p92 = scmp.ne.s32.totalorder %s81, %s82
      %p93 = scmp.eq.s32.totalorder %s21, 0
      %p94 = por %p92, %p93
      %p95 = scmp.ne.s32.totalorder %s81, %s82
      %p96 = scmp.eq.s32.totalorder %s22, 1
      %p97 = por %p95, %p96
      %p99 = scmp.ne.s32.totalorder %s82, %s98
      %p100 = scmp.eq.s32.totalorder %s22, 0
      %p101 = por %p99, %p100
      %s103 = sadd.s32 %s102, 1
      %p106 = scmp.eq.s32.totalorder %s16, 1
      %p107 = scmp.ne.s32.totalorder %s102, %s104
      %p108 = scmp.eq.s32.totalorder %s16, 0
      %p109 = por %p107, %p108
      %p110 = scmp.ne.s32.totalorder %s102, %s104
      %p111 = scmp.eq.s32.totalorder %s21, 1
      %p112 = por %p110, %p111
      %p113 = scmp.ne.s32.totalorder %s104, %s105
      %p114 = scmp.eq.s32.totalorder %s21, 0
      %p115 = por %p113, %p114
      %p116 = scmp.ne.s32.totalorder %s104, %s105
      %p117 = scmp.eq.s32.totalorder %s22, 1
      %p118 = por %p116, %p117
      %p120 = scmp.ne.s32.totalorder %s105, %s119
      %p121 = scmp.eq.s32.totalorder %s22, 0
      %p122 = por %p120, %p121
      %p123 = scmp.le.s32.totalorder 1, %s16
      %p124 = scmp.lt.s32.totalorder %s16, 3
      %p125 = pnand %p123, %p124
      %p126 = pneg %p125
      // Predicated region
      $region9: #{tpu_custom_call.1} parent=5 // pred_check
        _
      $region10: #{tpu_custom_call.1} parent=5 // pred_check_branch
        %128 = sbr.rel (%p125) target = $region12
      $region11: #{tpu_custom_call.1} parent=5 // pred_region
        %s129 = ssub.s32 %s16, 1
      $region12: #{tpu_custom_call.1} parent=5 // pred_fallthru
        _
      %p130 = scmp.lt.s32.totalorder %s16, 2
      // Predicated region
      $region13: #{tpu_custom_call.1} parent=5 // pred_check
        %p131 = pneg %p130
      $region14: #{tpu_custom_call.1} parent=5 // pred_check_branch
        %133 = sbr.rel (%p131) target = $region16
      $region15: #{tpu_custom_call.1} parent=5 // pred_region
        // Predicated region
        $region17: #{tpu_custom_call.1} parent=15 // pred_check
          %p134 = pneg %p36
        $region18: #{tpu_custom_call.1} parent=15 // pred_check_branch
          %136 = sbr.rel (%p134) target = $region20
        $region19: #{tpu_custom_call.1} parent=15 // pred_region
          %s137 = sand.u32 %s26, 1
          %s138 = scalar_lea.sflag [#allocation6], %s137
          %s139 = sand.u32 %s26, 1
          %s140 = smul.addr %s139, 8
          %s141 = scalar_lea.vmem [#allocation5], %s140
          %s143 = ssub.s32 128, 128
          %144 = vsyncadd %s138, %s143
          %s145 = smul.addr %s16, 128
          %s146 = scalar_lea.hbm %s0, %s145
          %s148 = sshll.u32 %s141, 4
          %s149 = int_to_ptr.vmem [resolvable:$true] %s148
          %151 = dma.hbm_to_vmem [thread:$0]  %s146, 128, %s149, %s138
        $region20: #{tpu_custom_call.1} parent=15 // pred_fallthru
          _
        // Predicated region
        $region21: #{tpu_custom_call.1} parent=15 // pred_check
          %p152 = pneg %p62
        $region22: #{tpu_custom_call.1} parent=15 // pred_check_branch
          %154 = sbr.rel (%p152) target = $region24
        $region23: #{tpu_custom_call.1} parent=15 // pred_region
          %s155 = sand.u32 %s16, 1
          %s156 = scalar_lea.sflag [#allocation9], %s155
          %s157 = sand.u32 %s52, 1
          %s158 = smul.addr %s157, 8
          %s159 = scalar_lea.vmem [#allocation8], %s158
          %s161 = ssub.s32 128, 128
          %162 = vsyncadd %s156, %s161
          %s163 = smul.addr %s16, 128
          %s164 = scalar_lea.hbm %s1, %s163
          %s166 = sshll.u32 %s159, 4
          %s167 = int_to_ptr.vmem [resolvable:$true] %s166
          %169 = dma.hbm_to_vmem [thread:$0]  %s164, 128, %s167, %s156
        $region24: #{tpu_custom_call.1} parent=15 // pred_fallthru
          _
        // Predicated region
        $region25: #{tpu_custom_call.1} parent=15 // pred_check
          %p170 = pneg %p88
        $region26: #{tpu_custom_call.1} parent=15 // pred_check_branch
          %172 = sbr.rel (%p170) target = $region28
        $region27: #{tpu_custom_call.1} parent=15 // pred_region
          %s173 = sand.u32 %s16, 1
          %s174 = scalar_lea.sflag [#allocation9], %s173
          %s175 = sand.u32 %s78, 1
          %s176 = smul.addr %s175, 8
          %s177 = scalar_lea.vmem [#allocation10], %s176
          %s179 = ssub.s32 128, 128
          %180 = vsyncadd %s174, %s179
          %s181 = smul.addr %s16, 128
          %s182 = scalar_lea.hbm %s2, %s181
          %s184 = sshll.u32 %s177, 4
          %s185 = int_to_ptr.vmem [resolvable:$true] %s184
          %187 = dma.hbm_to_vmem [thread:$0]  %s182, 128, %s185, %s174
        $region28: #{tpu_custom_call.1} parent=15 // pred_fallthru
          _
      $region16: #{tpu_custom_call.1} parent=5 // pred_fallthru
        _
      %p188 = scmp.le.s32.totalorder 1, %s16
      %p189 = scmp.lt.s32.totalorder %s16, 3
      %p190 = pnand %p188, %p189
      %p191 = pneg %p190
      // Predicated region
      $region29: #{tpu_custom_call.1} parent=5 // pred_check
        _
      $region30: #{tpu_custom_call.1} parent=5 // pred_check_branch
        %193 = sbr.rel (%p190) target = $region32
      $region31: #{tpu_custom_call.1} parent=5 // pred_region
        %s194 = ssub.s32 %s16, 1
        %s195 = sand.u32 %s29, 1
        %s196 = scalar_lea.sflag [#allocation6], %s195
        %s197 = sand.u32 %s29, 1
        %s198 = smul.addr %s197, 8
        %s199 = scalar_lea.vmem [#allocation5], %s198
        // Predicated region
        $region33: #{tpu_custom_call.1} parent=31 // pred_check
          %p200 = pneg %p42
        $region34: #{tpu_custom_call.1} parent=31 // pred_check_branch
          %202 = sbr.rel (%p200) target = $region36
        $region35: #{tpu_custom_call.1} parent=31 // pred_region
          %203 = dma.done %s196, 128
        $region36: #{tpu_custom_call.1} parent=31 // pred_fallthru
          _
        %s204 = sand.u32 %s21, 1
        %s205 = scalar_lea.sflag [#allocation9], %s204
        %s206 = sand.u32 %s55, 1
        %s207 = smul.addr %s206, 8
        %s208 = scalar_lea.vmem [#allocation8], %s207
        // Predicated region
        $region37: #{tpu_custom_call.1} parent=31 // pred_check
          %p209 = pneg %p68
        $region38: #{tpu_custom_call.1} parent=31 // pred_check_branch
          %211 = sbr.rel (%p209) target = $region40
        $region39: #{tpu_custom_call.1} parent=31 // pred_region
          %212 = dma.done %s205, 128
        $region40: #{tpu_custom_call.1} parent=31 // pred_fallthru
          _
        %s213 = sand.u32 %s21, 1
        %s214 = scalar_lea.sflag [#allocation9], %s213
        %s215 = sand.u32 %s81, 1
        %s216 = smul.addr %s215, 8
        %s217 = scalar_lea.vmem [#allocation10], %s216
        // Predicated region
        $region41: #{tpu_custom_call.1} parent=31 // pred_check
          %p218 = pneg %p94
        $region42: #{tpu_custom_call.1} parent=31 // pred_check_branch
          %220 = sbr.rel (%p218) target = $region44
        $region43: #{tpu_custom_call.1} parent=31 // pred_region
          %221 = dma.done %s214, 128
        $region44: #{tpu_custom_call.1} parent=31 // pred_fallthru
          _
        %s222 = sand.u32 %s29, 1
        %s223 = scalar_lea.sflag [#allocation6], %s222
        %s224 = sand.u32 %s29, 1
        %s225 = smul.addr %s224, 8
        %s226 = scalar_lea.vmem [#allocation5], %s225
        %p227 = pneg %p42
        %p228 = pneg %p39
        %s229 = sand.u32 %s21, 1
        %s230 = scalar_lea.sflag [#allocation9], %s229
        %s231 = sand.u32 %s55, 1
        %s232 = smul.addr %s231, 8
        %s233 = scalar_lea.vmem [#allocation8], %s232
        %p234 = pneg %p68
        %p235 = pneg %p65
        %s236 = sand.u32 %s21, 1
        %s237 = scalar_lea.sflag [#allocation9], %s236
        %s238 = sand.u32 %s81, 1
        %s239 = smul.addr %s238, 8
        %s240 = scalar_lea.vmem [#allocation10], %s239
        %p241 = pneg %p94
        %p242 = pneg %p91
        %p243 = pneg %p115
        %p244 = pneg %p112
        %v245 = vlaneseq
        %v246 = vshrl.u32 %v245, 7
        %v247 = vlaneseq
        %v248 = vand.u32 %v247, 127
        %p249 = scmp.eq.s32.totalorder %s21, 0
        // Predicated region
        $region45: #{tpu_custom_call.1} parent=31 // pred_check
          %p250 = pneg %p249
        $region46: #{tpu_custom_call.1} parent=31 // pred_check_branch
          %252 = sbr.rel (%p250) target = $region48
        $region47: #{tpu_custom_call.1} parent=31 // pred_region
          %253 = vst [vmem:[#allocation2] sm:$0xff] -inf
          %254 = vst [vmem:[#allocation11] sm:$0xff] 2147483647
        $region48: #{tpu_custom_call.1} parent=31 // pred_fallthru
          _
        %v255 = vld [vmem:[%s199] sm:$0xff]
        %v256 = vld [vmem:[%s208] sm:$0xff]
        %v257 = vld [vmem:[%s217] sm:$0xff]
        %v258 = vmul.f32 %v256, %v257
        %v259 = vadd.f32 %v255, %v258
        %s260 = smul.u32 %s21, 8
        %v261 = vstv %s260
        %v262 = vadd.s32 %v261, %v246
        %v263 = vmul.u32 %v262, 128
        %v264 = vadd.s32 %v263, %v248
        %vm265 = vcmp.lt.s32.totalorder %v264, 2000
        %v266 = vsel %vm265, %v259, -inf
        %267 = vst [vmem:[#allocation3] sm:$0xff] %v266
        %v268 = vsel %vm265, %v264, 2147483647
        %269 = vst [vmem:[#allocation4] sm:$0xff] %v268
        %v270 = vld [vmem:[#allocation2] sm:$0xff]
        %v271 = vld [vmem:[#allocation11] sm:$0xff]
        %v272 = vld [vmem:[#allocation3] sm:$0xff]
        %v273 = vld [vmem:[#allocation4] sm:$0xff]
        %vm274 = vcmp.gt.f32.partialorder %v272, %v270
        %v275 = vmax.f32 %v270, %v272
        %v276 = vsel %vm274, %v273, %v271
        %277 = vmax.xlane.f32.xlu0 %v275
        %v278 = vpop.xlane.xlu0 %277
        %v279 = vrot.slane %v278, 4
        %v280 = vmax.f32 %v278, %v279
        %v281 = vrot.slane %v280, 2
        %v282 = vmax.f32 %v280, %v281
        %v283 = vrot.slane %v282, 1
        %v284 = vmax.f32 %v282, %v283
        %s285 = vtos %v284
        %v286 = vstv %s285
        %vm287 = vcmp.ge.f32.partialorder %v275, %v286
        %v288 = vsel %vm287, %v276, 2147483647
        %v289 = vand.u32 %v288, 65535
        %v290 = vshra.s32 %v288, 16
        %v291 = vcvt.s32.f32 %v289
        %v292 = vcvt.s32.f32 %v290
        %293 = vmin.xlane.f32.xlu0 %v292
        %v294 = vpop.xlane.xlu0 %293
        %vm295 = vcmp.eq.f32.partialorder %v292, %v294
        %v296 = vsel %vm295, %v291, inf
        %297 = vmin.xlane.f32.xlu0 %v296
        %v298 = vpop.xlane.xlu0 %297
        %v299 = vcvt.f32.s32 %v298
        %v300 = vcvt.f32.s32 %v294
        %v301 = vshll.u32 %v300, 16
        %v302 = vadd.s32 %v301, %v299
        %v303 = vrot.slane %v302, 4
        %vm304 = vcmp.lt.s32.totalorder %v302, %v303
        %v305 = vsel %vm304, %v302, %v303
        %v306 = vrot.slane %v305, 2
        %vm307 = vcmp.lt.s32.totalorder %v305, %v306
        %v308 = vsel %vm307, %v305, %v306
        %v309 = vrot.slane %v308, 1
        %vm310 = vcmp.lt.s32.totalorder %v308, %v309
        %v311 = vsel %vm310, %v308, %v309
        %s312 = vtos %v311
        %vm313 = vcmp.eq.s32.totalorder %v246, 0
        %vm314 = vcmp.eq.s32.totalorder %v248, 0
        %vm315 = vmand %vm313, %vm314
        %v316 = vsel %vm315, %v286, -inf
        %v317 = vstv %s312
        %v318 = vsel %vm315, %v317, 2147483647
        %vm319 = vcmp.eq.s32.totalorder %v271, %v317
        %v320 = vsel %vm319, -inf, %v270
        %v321 = vsel %vm319, 2147483647, %v271
        %vm322 = vcmp.eq.s32.totalorder %v273, %v317
        %v323 = vsel %vm322, -inf, %v272
        %324 = vst [vmem:[#allocation3] sm:$0xff] %v323
        %v325 = vsel %vm322, 2147483647, %v273
        %326 = vst [vmem:[#allocation4] sm:$0xff] %v325
        %v327 = vld [vmem:[#allocation3] sm:$0xff]
        %v328 = vld [vmem:[#allocation4] sm:$0xff]
        %vm329 = vcmp.gt.f32.partialorder %v327, %v320
        %v330 = vmax.f32 %v320, %v327
        %v331 = vsel %vm329, %v328, %v321
        %332 = vmax.xlane.f32.xlu0 %v330
        %v333 = vpop.xlane.xlu0 %332
        %v334 = vrot.slane %v333, 4
        %v335 = vmax.f32 %v333, %v334
        %v336 = vrot.slane %v335, 2
        %v337 = vmax.f32 %v335, %v336
        %v338 = vrot.slane %v337, 1
        %v339 = vmax.f32 %v337, %v338
        %s340 = vtos %v339
        %v341 = vstv %s340
        %vm342 = vcmp.ge.f32.partialorder %v330, %v341
        %v343 = vsel %vm342, %v331, 2147483647
        %v344 = vand.u32 %v343, 65535
        %v345 = vshra.s32 %v343, 16
        %v346 = vcvt.s32.f32 %v344
        %v347 = vcvt.s32.f32 %v345
        %348 = vmin.xlane.f32.xlu0 %v347
        %v349 = vpop.xlane.xlu0 %348
        %vm350 = vcmp.eq.f32.partialorder %v347, %v349
        %v351 = vsel %vm350, %v346, inf
        %352 = vmin.xlane.f32.xlu0 %v351
        %v353 = vpop.xlane.xlu0 %352
        %v354 = vcvt.f32.s32 %v353
        %v355 = vcvt.f32.s32 %v349
        %v356 = vshll.u32 %v355, 16
        %v357 = vadd.s32 %v356, %v354
        %v358 = vrot.slane %v357, 4
        %vm359 = vcmp.lt.s32.totalorder %v357, %v358
        %v360 = vsel %vm359, %v357, %v358
        %v361 = vrot.slane %v360, 2
        %vm362 = vcmp.lt.s32.totalorder %v360, %v361
        %v363 = vsel %vm362, %v360, %v361
        %v364 = vrot.slane %v363, 1
        %vm365 = vcmp.lt.s32.totalorder %v363, %v364
        %v366 = vsel %vm365, %v363, %v364
        %s367 = vtos %v366
        %vm368 = vcmp.eq.s32.totalorder %v248, 1
        %vm369 = vmand %vm313, %vm368
        %v370 = vsel %vm369, %v341, %v316
        %v371 = vstv %s367
        %v372 = vsel %vm369, %v371, %v318
        %vm373 = vcmp.eq.s32.totalorder %v321, %v371
        %v374 = vsel %vm373, -inf, %v320
        %v375 = vsel %vm373, 2147483647, %v321
        %vm376 = vcmp.eq.s32.totalorder %v328, %v371
        %v377 = vsel %vm376, -inf, %v327
        %378 = vst [vmem:[#allocation3] sm:$0xff] %v377
        %v379 = vsel %vm376, 2147483647, %v328
        %380 = vst [vmem:[#allocation4] sm:$0xff] %v379
        %v381 = vld [vmem:[#allocation3] sm:$0xff]
        %v382 = vld [vmem:[#allocation4] sm:$0xff]
        %vm383 = vcmp.gt.f32.partialorder %v381, %v374
        %v384 = vmax.f32 %v374, %v381
        %v385 = vsel %vm383, %v382, %v375
        %386 = vmax.xlane.f32.xlu0 %v384
        %v387 = vpop.xlane.xlu0 %386
        %v388 = vrot.slane %v387, 4
        %v389 = vmax.f32 %v387, %v388
        %v390 = vrot.slane %v389, 2
        %v391 = vmax.f32 %v389, %v390
        %v392 = vrot.slane %v391, 1
        %v393 = vmax.f32 %v391, %v392
        %s394 = vtos %v393
        %v395 = vstv %s394
        %vm396 = vcmp.ge.f32.partialorder %v384, %v395
        %v397 = vsel %vm396, %v385, 2147483647
        %v398 = vand.u32 %v397, 65535
        %v399 = vshra.s32 %v397, 16
        %v400 = vcvt.s32.f32 %v398
        %v401 = vcvt.s32.f32 %v399
        %402 = vmin.xlane.f32.xlu0 %v401
        %v403 = vpop.xlane.xlu0 %402
        %vm404 = vcmp.eq.f32.partialorder %v401, %v403
        %v405 = vsel %vm404, %v400, inf
        %406 = vmin.xlane.f32.xlu0 %v405
        %v407 = vpop.xlane.xlu0 %406
        %v408 = vcvt.f32.s32 %v407
        %v409 = vcvt.f32.s32 %v403
        %v410 = vshll.u32 %v409, 16
        %v411 = vadd.s32 %v410, %v408
        %v412 = vrot.slane %v411, 4
        %vm413 = vcmp.lt.s32.totalorder %v411, %v412
        %v414 = vsel %vm413, %v411, %v412
        %v415 = vrot.slane %v414, 2
        %vm416 = vcmp.lt.s32.totalorder %v414, %v415
        %v417 = vsel %vm416, %v414, %v415
        %v418 = vrot.slane %v417, 1
        %vm419 = vcmp.lt.s32.totalorder %v417, %v418
        %v420 = vsel %vm419, %v417, %v418
        %s421 = vtos %v420
        %vm422 = vcmp.eq.s32.totalorder %v248, 2
        %vm423 = vmand %vm313, %vm422
        %v424 = vsel %vm423, %v395, %v370
        %v425 = vstv %s421
        %v426 = vsel %vm423, %v425, %v372
        %vm427 = vcmp.eq.s32.totalorder %v375, %v425
        %v428 = vsel %vm427, -inf, %v374
        %v429 = vsel %vm427, 2147483647, %v375
        %vm430 = vcmp.eq.s32.totalorder %v382, %v425
        %v431 = vsel %vm430, -inf, %v381
        %432 = vst [vmem:[#allocation3] sm:$0xff] %v431
        %v433 = vsel %vm430, 2147483647, %v382
        %434 = vst [vmem:[#allocation4] sm:$0xff] %v433
        %v435 = vld [vmem:[#allocation3] sm:$0xff]
        %v436 = vld [vmem:[#allocation4] sm:$0xff]
        %vm437 = vcmp.gt.f32.partialorder %v435, %v428
        %v438 = vmax.f32 %v428, %v435
        %v439 = vsel %vm437, %v436, %v429
        %440 = vmax.xlane.f32.xlu0 %v438
        %v441 = vpop.xlane.xlu0 %440
        %v442 = vrot.slane %v441, 4
        %v443 = vmax.f32 %v441, %v442
        %v444 = vrot.slane %v443, 2
        %v445 = vmax.f32 %v443, %v444
        %v446 = vrot.slane %v445, 1
        %v447 = vmax.f32 %v445, %v446
        %s448 = vtos %v447
        %v449 = vstv %s448
        %vm450 = vcmp.ge.f32.partialorder %v438, %v449
        %v451 = vsel %vm450, %v439, 2147483647
        %v452 = vand.u32 %v451, 65535
        %v453 = vshra.s32 %v451, 16
        %v454 = vcvt.s32.f32 %v452
        %v455 = vcvt.s32.f32 %v453
        %456 = vmin.xlane.f32.xlu0 %v455
        %v457 = vpop.xlane.xlu0 %456
        %vm458 = vcmp.eq.f32.partialorder %v455, %v457
        %v459 = vsel %vm458, %v454, inf
        %460 = vmin.xlane.f32.xlu0 %v459
        %v461 = vpop.xlane.xlu0 %460
        %v462 = vcvt.f32.s32 %v461
        %v463 = vcvt.f32.s32 %v457
        %v464 = vshll.u32 %v463, 16
        %v465 = vadd.s32 %v464, %v462
        %v466 = vrot.slane %v465, 4
        %vm467 = vcmp.lt.s32.totalorder %v465, %v466
        %v468 = vsel %vm467, %v465, %v466
        %v469 = vrot.slane %v468, 2
        %vm470 = vcmp.lt.s32.totalorder %v468, %v469
        %v471 = vsel %vm470, %v468, %v469
        %v472 = vrot.slane %v471, 1
        %vm473 = vcmp.lt.s32.totalorder %v471, %v472
        %v474 = vsel %vm473, %v471, %v472
        %s475 = vtos %v474
        %vm476 = vcmp.eq.s32.totalorder %v248, 3
        %vm477 = vmand %vm313, %vm476
        %v478 = vsel %vm477, %v449, %v424
        %v479 = vstv %s475
        %v480 = vsel %vm477, %v479, %v426
        %481 = vst [vmem:[#allocation2] sm:$0xff] %v478
        %482 = vst [vmem:[#allocation11] sm:$0xff] %v480
        // Predicated region
        $region49: #{tpu_custom_call.1} parent=31 // pred_check
          %p483 = pneg %p112
        $region50: #{tpu_custom_call.1} parent=31 // pred_check_branch
          %485 = sbr.rel (%p483) target = $region52
        $region51: #{tpu_custom_call.1} parent=31 // pred_region
          %s487 = ssub.s32 128, 128
          %488 = vsyncadd [#allocation7], %s487
          %s490 = sshll.u32 [#allocation11], 4
          %s491 = int_to_ptr.vmem [resolvable:$true] %s490
          %493 = dma.vmem_to_hbm [thread:$0]  %s491, 128, %s3, [#allocation7]
        $region52: #{tpu_custom_call.1} parent=31 // pred_fallthru
          _
        // Predicated region
        $region53: #{tpu_custom_call.1} parent=31 // pred_check
          %p494 = pneg %p112
        $region54: #{tpu_custom_call.1} parent=31 // pred_check_branch
          %496 = sbr.rel (%p494) target = $region56
        $region55: #{tpu_custom_call.1} parent=31 // pred_region
          %497 = dma.done [#allocation7], 128
        $region56: #{tpu_custom_call.1} parent=31 // pred_fallthru
          _
      $region32: #{tpu_custom_call.1} parent=5 // pred_fallthru
        _
      %p498 = scmp.le.s32.totalorder 2, %s16
      // Predicated region
      $region57: #{tpu_custom_call.1} parent=5 // pred_check
        %p499 = pneg %p498
      $region58: #{tpu_custom_call.1} parent=5 // pred_check_branch
        %501 = sbr.rel (%p499) target = $region60
      $region59: #{tpu_custom_call.1} parent=5 // pred_region
        %s502 = ssub.s32 %s16, 2
      $region60: #{tpu_custom_call.1} parent=5 // pred_fallthru
        _
    $region6: #{tpu_custom_call.1} parent=1 // loop_footer
      %s20 = sadd.s32 1, %s16
    $region7: #{tpu_custom_call.1} parent=1 // loop_footer_branch
      %15 = sbr.rel target = $region3
    $region8: #{tpu_custom_call.1} parent=1 // loop_exit
      _
    %503 = vsyncpa [#allocation6], 1
    %s504 = scalar_lea.sflag [#allocation6], 1
    %505 = vsyncpa %s504, 1
    %506 = vsyncpa [#allocation9], 1
    %s507 = scalar_lea.sflag [#allocation9], 1
    %508 = vsyncpa %s507, 1
    %509 = vsyncpa [#allocation7], 1
    %s510 = scalar_lea.sflag [#allocation7], 1
    %511 = vsyncpa %s510, 1

</llo_original>
